<compile_context>
chip_gen: v5e
topology: v5e:2x2
jax: 0.10.0
libtpu: 0.0.40
codegen_flags: <defaults>
</compile_context>

<pallas_src>
import jax
import jax.numpy as jnp
from jax.experimental import pallas as pl
from jax.experimental.pallas import tpu as pltpu


def graphsage_kernel(a_ref, h_ref, w_ref, b_ref, o_ref):
    # a_ref: (N, N) bf16 dense adjacency, A[dst, src] in {0, 1}
    # h_ref: (N, F) f32 node features
    # w_ref: (F, O_PAD) f32 fc_neigh weight, transposed and lane-padded
    # b_ref: (1, O_PAD) f32 bias, lane-padded
    # o_ref: (1, O_PAD) f32 per-feature mean over nodes (padded)
    N = a_ref.shape[0]
    A = a_ref[...]                                                     # bf16 (N, N)

    # In-degree per dst row via the MXU (A @ 1); avoids a (N,N) cross-lane XLU reduce.
    ones_col = jnp.ones((N, 1), dtype=A.dtype)
    deg = jnp.dot(A, ones_col, preferred_element_type=jnp.float32)     # (N, 1) f32, exact

    # Fold the GCN row-normalization 1/(deg+1) and the final mean-over-nodes 1/N
    # into a single per-dst weight c.
    c = pl.reciprocal(deg + 1.0, approx=False) * (1.0 / N)             # (N, 1)

    # s = c^T A as a weighted column-sum (VPU mul + sublane reduce; MXU stays free).
    a_f32 = A.astype(jnp.float32)                                      # 0/1 -> exact
    s = jnp.sum(c * a_f32, axis=0, keepdims=True)                      # (1, N)

    # t = c^T A h + c^T h   (second term is the folded self-loop of the gcn aggregator)
    h = h_ref[...]
    t = jnp.dot(s, h, preferred_element_type=jnp.float32) \
        + jnp.sum(c * h, axis=0, keepdims=True)                        # (1, F)

    # Final projection + bias (bias commutes with the mean, added once here).
    o_ref[...] = jnp.dot(t, w_ref[...],
                         preferred_element_type=jnp.float32) + b_ref[...]   # (1, O_PAD)


def graphsage_forward(adj, node_feat, w_neigh, bias):
    """adj: (N, N) f32, node_feat: (N, F) f32, w_neigh: (O, F), bias: (O,). Returns (O, 1)."""
    # TODO(synk): nn.Dropout is identity in eval mode; training-mode dropout not implemented.
    N, F = node_feat.shape
    O = w_neigh.shape[0]
    O_PAD = 128  # lane-dense small operands / output; sliced back below

    adj_bf16 = adj.astype(jnp.bfloat16)                                # 0/1 values: exact
    w_t_pad = jnp.zeros((F, O_PAD), jnp.float32).at[:, :O].set(
        w_neigh.T.astype(jnp.float32))
    b_pad = jnp.zeros((1, O_PAD), jnp.float32).at[:, :O].set(
        bias.astype(jnp.float32)[None, :])

    out = pl.pallas_call(
        graphsage_kernel,
        out_shape=jax.ShapeDtypeStruct((1, O_PAD), jnp.float32),
        in_specs=[pl.BlockSpec(memory_space=pltpu.MemorySpace.VMEM)] * 4,
        out_specs=pl.BlockSpec(memory_space=pltpu.MemorySpace.VMEM),
    )(adj_bf16, node_feat.astype(jnp.float32), w_t_pad, b_pad)

    return out[0, :O].reshape(O, 1)


def graphsage_reference(adj, node_feat, w_neigh, bias):
    neigh = adj @ node_feat
    deg = jnp.sum(adj, axis=-1, keepdims=True)
    h_neigh = (neigh + node_feat) / (deg + 1.0)
    out = h_neigh @ w_neigh.T + bias[None, :]            # (N, 10)
    h = out.reshape(-1, 10, 1)
    h = jnp.mean(h, axis=0)                              # (10, 1)
    return jnp.mean(h, axis=1, keepdims=True)            # (10, 1)


if __name__ == "__main__":
    # data_info = {'in_size': 16, 'out_size': 10, 'num_nodes': 128}; num_layers=1, gcn aggregator
    N, IN_SIZE, OUT_SIZE = 128, 16, 10

    key = jax.random.PRNGKey(0)
    k_adj, k_feat, k_w = jax.random.split(key, 3)

    # Dense random adjacency (directed, no self loops), A[dst, src] = 1.0
    adj = jax.random.bernoulli(k_adj, p=0.1, shape=(N, N)).astype(jnp.float32)
    adj = adj * (1.0 - jnp.eye(N, dtype=jnp.float32))

    node_feat = jax.random.normal(k_feat, (N, IN_SIZE), dtype=jnp.float32)

    # Deterministic parameter init (xavier-uniform-like for fc_neigh, zero bias, as in DGL)
    bound = (6.0 / (IN_SIZE + OUT_SIZE)) ** 0.5
    w_neigh = jax.random.uniform(k_w, (OUT_SIZE, IN_SIZE), jnp.float32, -bound, bound)
    bias = jnp.zeros((OUT_SIZE,), dtype=jnp.float32)

    result = graphsage_forward(adj, node_feat, w_neigh, bias)
    result = jax.block_until_ready(result)

    ref = graphsage_reference(adj, node_feat, w_neigh, bias)
    assert result.shape == (OUT_SIZE, 1)
    assert jnp.allclose(result, ref, atol=1e-4, rtol=1e-4), (result, ref)
    print("KERNEL_OK")
</pallas_src>

<mosaic_0001>
module attributes {stable_mosaic.version = 11 : i64} {
  func.func @graphsage_kernel(%arg0: memref<128x128xbf16, #tpu.memory_space<vmem>>, %arg1: memref<128x16xf32, #tpu.memory_space<vmem>>, %arg2: memref<16x128xf32, #tpu.memory_space<vmem>>, %arg3: memref<1x128xf32, #tpu.memory_space<vmem>>, %arg4: memref<1x128xf32, #tpu.memory_space<vmem>>) attributes {dimension_semantics = [], scalar_prefetch = 0 : i64, scratch_operands = 0 : i64, tpu.core_type = #tpu.core_type<tc>} {
    %c0 = arith.constant 0 : index
    %c0_0 = arith.constant 0 : index
    %0 = vector.load %arg0[%c0, %c0_0] : memref<128x128xbf16, #tpu.memory_space<vmem>>, vector<128x128xbf16>
    %cst = arith.constant 1.000000e+00 : bf16
    %1 = vector.broadcast %cst : bf16 to vector<128x1xbf16>
    %cst_1 = arith.constant dense<0.000000e+00> : vector<128x1xf32>
    %2 = tpu.matmul %0, %1, %cst_1 {dimension_numbers = #tpu.dot_dimension_numbers<[1], [0], [0], [1], [0, 0, 1, 1], [], []>} : vector<128x128xbf16>, vector<128x1xbf16>, vector<128x1xf32> -> vector<128x1xf32>
    %cst_2 = arith.constant 1.000000e+00 : f32
    %3 = vector.broadcast %cst_2 : f32 to vector<128x1xf32>
    %4 = arith.addf %2, %3 : vector<128x1xf32>
    %5 = tpu.reciprocal %4 : vector<128x1xf32> -> vector<128x1xf32>
    %cst_3 = arith.constant 7.812500e-03 : f32
    %6 = vector.broadcast %cst_3 : f32 to vector<128x1xf32>
    %7 = arith.mulf %5, %6 : vector<128x1xf32>
    %8 = arith.extf %0 : vector<128x128xbf16> to vector<128x128xf32>
    %9 = vector.broadcast %7 : vector<128x1xf32> to vector<128x128xf32>
    %10 = arith.mulf %9, %8 : vector<128x128xf32>
    %cst_4 = arith.constant dense<0.000000e+00> : vector<128xf32>
    %11 = vector.multi_reduction <add>, %10, %cst_4 [0] : vector<128x128xf32> to vector<128xf32>
    %12 = vector.shape_cast %11 : vector<128xf32> to vector<1x128xf32>
    %c0_5 = arith.constant 0 : index
    %c0_6 = arith.constant 0 : index
    %13 = vector.load %arg1[%c0_5, %c0_6] : memref<128x16xf32, #tpu.memory_space<vmem>>, vector<128x16xf32>
    %cst_7 = arith.constant dense<0.000000e+00> : vector<1x16xf32>
    %14 = tpu.matmul %12, %13, %cst_7 {dimension_numbers = #tpu.dot_dimension_numbers<[1], [0], [0], [1], [0, 0, 1, 1], [], []>} : vector<1x128xf32>, vector<128x16xf32>, vector<1x16xf32> -> vector<1x16xf32>
    %15 = vector.broadcast %7 : vector<128x1xf32> to vector<128x16xf32>
    %16 = arith.mulf %15, %13 : vector<128x16xf32>
    %cst_8 = arith.constant dense<0.000000e+00> : vector<16xf32>
    %17 = vector.multi_reduction <add>, %16, %cst_8 [0] : vector<128x16xf32> to vector<16xf32>
    %18 = vector.shape_cast %17 : vector<16xf32> to vector<1x16xf32>
    %19 = arith.addf %14, %18 : vector<1x16xf32>
    %c0_9 = arith.constant 0 : index
    %c0_10 = arith.constant 0 : index
    %20 = vector.load %arg2[%c0_9, %c0_10] : memref<16x128xf32, #tpu.memory_space<vmem>>, vector<16x128xf32>
    %cst_11 = arith.constant dense<0.000000e+00> : vector<1x128xf32>
    %21 = tpu.matmul %19, %20, %cst_11 {dimension_numbers = #tpu.dot_dimension_numbers<[1], [0], [0], [1], [0, 0, 1, 1], [], []>} : vector<1x16xf32>, vector<16x128xf32>, vector<1x128xf32> -> vector<1x128xf32>
    %c0_12 = arith.constant 0 : index
    %c0_13 = arith.constant 0 : index
    %22 = vector.load %arg3[%c0_12, %c0_13] : memref<1x128xf32, #tpu.memory_space<vmem>>, vector<1x128xf32>
    %23 = arith.addf %21, %22 : vector<1x128xf32>
    %c0_14 = arith.constant 0 : index
    %c0_15 = arith.constant 0 : index
    %24 = vector.load %arg4[%c0_14, %c0_15] : memref<1x128xf32, #tpu.memory_space<vmem>>, vector<1x128xf32>
    tpu.vector_store %arg4[%c0_14, %c0_15], %23 {strides = array<i32>} : memref<1x128xf32, #tpu.memory_space<vmem>>, vector<1x128xf32>,
    return
  }
}

</mosaic_0001>

<llo_original>
// kernel: tpu_custom_call.1
$region0: #{tpu_custom_call.1}
  #allocation0 [shape = 'u32[]', space=smem, size = 0x4, offset = 0x4, fixed_abs, tag = 'smem constant byte address 0x4 - core index']
  #allocation1 [shape = 'u32[72,128]{1,0:T(1,128)}', space=vmem, size = 0x9000, scoped, tag = 'internal scratch']
  %s0 = inlined_call_operand.vmem [shape: bf16[128,128], index: 0, kind: input, shape index: {}]
  %s1 = inlined_call_operand.vmem [shape: f32[128,16], index: 1, kind: input, shape index: {}]
  %s2 = inlined_call_operand.vmem [shape: f32[16,128], index: 2, kind: input, shape index: {}]
  %s3 = inlined_call_operand.vmem [shape: f32[1,128], index: 3, kind: input, shape index: {}]
  %s4 = inlined_call_operand.hbm [shape: f32[1,128], index: 4, kind: output, shape index: {}]
  %s5 = sld [smem:[#allocation0]]
  $region26: #{tpu_custom_call.1} parent=0
    _
  %s7 = ssub.s32 1, %s5
  %s8 = scalar_select 0, %s7, %s5
  $region1: #{tpu_custom_call.1} parent=0
    #allocation2 [shape = 'u8[512]{0}', space=vmem, size = 0x400, scoped, tag = 'output window, operand 0, single buffered']
    #allocation3 [shape = 's32[1]{0}', space=sflag, size = 0x4, scoped, tag = 'scoped memory for tpu_custom_call.1']
    %9 = vsyncpa [#allocation3], 0
    // Predicated region
    $region2: #{tpu_custom_call.1} parent=1 // pred_check
      _
    $region3: #{tpu_custom_call.1} parent=1 // pred_check_branch
      %11 = sbr.rel (0) target = $region5
    $region4: #{tpu_custom_call.1} parent=1 // pred_region
      _
    $region5: #{tpu_custom_call.1} parent=1 // pred_fallthru
      _
    // Predicated region
    $region6: #{tpu_custom_call.1} parent=1 // pred_check
      _
    $region7: #{tpu_custom_call.1} parent=1 // pred_check_branch
      %13 = sbr.rel (0) target = $region9
    $region8: #{tpu_custom_call.1} parent=1 // pred_region
      _
    $region9: #{tpu_custom_call.1} parent=1 // pred_fallthru
      _
    // Predicated region
    $region10: #{tpu_custom_call.1} parent=1 // pred_check
      _
    $region11: #{tpu_custom_call.1} parent=1 // pred_check_branch
      %15 = sbr.rel (0) target = $region13
    $region12: #{tpu_custom_call.1} parent=1 // pred_region
      _
    $region13: #{tpu_custom_call.1} parent=1 // pred_fallthru
      _
    // Predicated region
    $region14: #{tpu_custom_call.1} parent=1 // pred_check
      _
    $region15: #{tpu_custom_call.1} parent=1 // pred_check_branch
      %17 = sbr.rel (0) target = $region17
    $region16: #{tpu_custom_call.1} parent=1 // pred_region
      _
    $region17: #{tpu_custom_call.1} parent=1 // pred_fallthru
      _
    %v19 = vld [vmem:[%s0] sm:$0xf]
    %v20 = vld [vmem:[%s0 + $0x4] sm:$0xf]
    %v21 = vld [vmem:[%s0 + $0x8] sm:$0xf]
    %v22 = vld [vmem:[%s0 + $0xc] sm:$0xf]
    %v23 = vld [vmem:[%s0 + $0x10] sm:$0xf]
    %v24 = vld [vmem:[%s0 + $0x14] sm:$0xf]
    %v25 = vld [vmem:[%s0 + $0x18] sm:$0xf]
    %v26 = vld [vmem:[%s0 + $0x1c] sm:$0xf]
    %v27 = vld [vmem:[%s0 + $0x20] sm:$0xf]
    %v28 = vld [vmem:[%s0 + $0x24] sm:$0xf]
    %v29 = vld [vmem:[%s0 + $0x28] sm:$0xf]
    %v30 = vld [vmem:[%s0 + $0x2c] sm:$0xf]
    %v31 = vld [vmem:[%s0 + $0x30] sm:$0xf]
    %v32 = vld [vmem:[%s0 + $0x34] sm:$0xf]
    %v33 = vld [vmem:[%s0 + $0x38] sm:$0xf]
    %v34 = vld [vmem:[%s0 + $0x3c] sm:$0xf]
    %v51 = vunpack.c.l.b16 %v19
    %v52 = vunpack.c.l.b16 %v20
    %v53 = vunpack.c.l.b16 %v21
    %v54 = vunpack.c.l.b16 %v22
    %v55 = vunpack.c.l.b16 %v23
    %v56 = vunpack.c.l.b16 %v24
    %v57 = vunpack.c.l.b16 %v25
    %v58 = vunpack.c.l.b16 %v26
    %v59 = vunpack.c.l.b16 %v27
    %v60 = vunpack.c.l.b16 %v28
    %v61 = vunpack.c.l.b16 %v29
    %v62 = vunpack.c.l.b16 %v30
    %v63 = vunpack.c.l.b16 %v31
    %v64 = vunpack.c.l.b16 %v32
    %v65 = vunpack.c.l.b16 %v33
    %v66 = vunpack.c.l.b16 %v34
    %v67 = vpack.c.b16 %v52, %v51
    %v68 = vpack.c.b16 %v54, %v53
    %v69 = vpack.c.b16 %v56, %v55
    %v70 = vpack.c.b16 %v58, %v57
    %v71 = vpack.c.b16 %v60, %v59
    %v72 = vpack.c.b16 %v62, %v61
    %v73 = vpack.c.b16 %v64, %v63
    %v74 = vpack.c.b16 %v66, %v65
    %83 = vmatpush.bf16.msra.mxu0 1065369472
    %84 = vmatpush.bf16.msra.mxu0 1065369472
    %85 = vmatpush.bf16.msra.mxu0 1065369472
    %86 = vmatpush.bf16.msra.mxu0 1065369472
    %87 = vmatpush.bf16.msra.mxu0 1065369472
    %88 = vmatpush.bf16.msra.mxu0 1065369472
    %89 = vmatpush.bf16.msra.mxu0 1065369472
    %90 = vmatpush.bf16.msra.mxu0 1065369472
    %91 = vmatmul.bf16.gmra.mxu0 %v67
    %v92 = vpop.f32.mrf.mxu0
    %v93 = vadd.f32 1.0, %v92
    %v94 = vpop.f32.mrf.mxu0
    %v95 = vadd.f32 1.0, %v94
    %96 = vmatmul.bf16.gmra.mxu0 %v68
    %v97 = vpop.f32.mrf.mxu0
    %v98 = vadd.f32 1.0, %v97
    %v99 = vpop.f32.mrf.mxu0
    %v100 = vadd.f32 1.0, %v99
    %101 = vmatmul.bf16.gmra.mxu0 %v69
    %v102 = vpop.f32.mrf.mxu0
    %v103 = vadd.f32 1.0, %v102
    %v104 = vpop.f32.mrf.mxu0
    %v105 = vadd.f32 1.0, %v104
    %106 = vmatmul.bf16.gmra.mxu0 %v70
    %v107 = vpop.f32.mrf.mxu0
    %v108 = vadd.f32 1.0, %v107
    %v109 = vpop.f32.mrf.mxu0
    %v110 = vadd.f32 1.0, %v109
    %111 = vmatmul.bf16.gmra.mxu0 %v71
    %v112 = vpop.f32.mrf.mxu0
    %v113 = vadd.f32 1.0, %v112
    %v114 = vpop.f32.mrf.mxu0
    %v115 = vadd.f32 1.0, %v114
    %116 = vmatmul.bf16.gmra.mxu0 %v72
    %v117 = vpop.f32.mrf.mxu0
    %v118 = vadd.f32 1.0, %v117
    %v119 = vpop.f32.mrf.mxu0
    %v120 = vadd.f32 1.0, %v119
    %121 = vmatmul.bf16.gmra.mxu0 %v73
    %v122 = vpop.f32.mrf.mxu0
    %v123 = vadd.f32 1.0, %v122
    %v124 = vpop.f32.mrf.mxu0
    %v125 = vadd.f32 1.0, %v124
    %126 = vmatmul.bf16.gmra.mxu0 %v74
    %v127 = vpop.f32.mrf.mxu0
    %v128 = vadd.f32 1.0, %v127
    %v129 = vpop.f32.mrf.mxu0
    %v130 = vadd.f32 1.0, %v129
    %131 = vdwg.mxu0
    %v132 = vrcp.pop %v93
    %v133 = vmul.f32 %v93, %v132
    %v134 = vsub.f32 1.0, %v133
    %v135 = vmul.f32 %v132, %v134
    %v136 = vadd.f32 %v132, %v135
    %vm137 = vweird.f32 %v93
    %vm138 = vweird.f32 %v132
    %vm139 = vmor %vm137, %vm138
    %v140 = vsel %vm139, %v132, %v136
    %v141 = vand.u32 2147483647, %v93
    %vm142 = vcmp.eq.f32.partialorder %v141, 8.507059e+37
    %v143 = vand.u32 %v93, 2147483648
    %v144 = vor.u32 1.1754944e-38, %v143
    %v145 = vsel %vm142, %v144, %v140
    %v146 = vrcp.pop %v95
    %v147 = vmul.f32 %v95, %v146
    %v148 = vsub.f32 1.0, %v147
    %v149 = vmul.f32 %v146, %v148
    %v150 = vadd.f32 %v146, %v149
    %vm151 = vweird.f32 %v95
    %vm152 = vweird.f32 %v146
    %vm153 = vmor %vm151, %vm152
    %v154 = vsel %vm153, %v146, %v150
    %v155 = vand.u32 2147483647, %v95
    %vm156 = vcmp.eq.f32.partialorder %v155, 8.507059e+37
    %v157 = vand.u32 %v95, 2147483648
    %v158 = vor.u32 1.1754944e-38, %v157
    %v159 = vsel %vm156, %v158, %v154
    %v160 = vrcp.pop %v98
    %v161 = vmul.f32 %v98, %v160
    %v162 = vsub.f32 1.0, %v161
    %v163 = vmul.f32 %v160, %v162
    %v164 = vadd.f32 %v160, %v163
    %vm165 = vweird.f32 %v98
    %vm166 = vweird.f32 %v160
    %vm167 = vmor %vm165, %vm166
    %v168 = vsel %vm167, %v160, %v164
    %v169 = vand.u32 2147483647, %v98
    %vm170 = vcmp.eq.f32.partialorder %v169, 8.507059e+37
    %v171 = vand.u32 %v98, 2147483648
    %v172 = vor.u32 1.1754944e-38, %v171
    %v173 = vsel %vm170, %v172, %v168
    %v174 = vrcp.pop %v100
    %v175 = vmul.f32 %v100, %v174
    %v176 = vsub.f32 1.0, %v175
    %v177 = vmul.f32 %v174, %v176
    %v178 = vadd.f32 %v174, %v177
    %vm179 = vweird.f32 %v100
    %vm180 = vweird.f32 %v174
    %vm181 = vmor %vm179, %vm180
    %v182 = vsel %vm181, %v174, %v178
    %v183 = vand.u32 2147483647, %v100
    %vm184 = vcmp.eq.f32.partialorder %v183, 8.507059e+37
    %v185 = vand.u32 %v100, 2147483648
    %v186 = vor.u32 1.1754944e-38, %v185
    %v187 = vsel %vm184, %v186, %v182
    %v188 = vrcp.pop %v103
    %v189 = vmul.f32 %v103, %v188
    %v190 = vsub.f32 1.0, %v189
    %v191 = vmul.f32 %v188, %v190
    %v192 = vadd.f32 %v188, %v191
    %vm193 = vweird.f32 %v103
    %vm194 = vweird.f32 %v188
    %vm195 = vmor %vm193, %vm194
    %v196 = vsel %vm195, %v188, %v192
    %v197 = vand.u32 2147483647, %v103
    %vm198 = vcmp.eq.f32.partialorder %v197, 8.507059e+37
    %v199 = vand.u32 %v103, 2147483648
    %v200 = vor.u32 1.1754944e-38, %v199
    %v201 = vsel %vm198, %v200, %v196
    %v202 = vrcp.pop %v105
    %v203 = vmul.f32 %v105, %v202
    %v204 = vsub.f32 1.0, %v203
    %v205 = vmul.f32 %v202, %v204
    %v206 = vadd.f32 %v202, %v205
    %vm207 = vweird.f32 %v105
    %vm208 = vweird.f32 %v202
    %vm209 = vmor %vm207, %vm208
    %v210 = vsel %vm209, %v202, %v206
    %v211 = vand.u32 2147483647, %v105
    %vm212 = vcmp.eq.f32.partialorder %v211, 8.507059e+37
    %v213 = vand.u32 %v105, 2147483648
    %v214 = vor.u32 1.1754944e-38, %v213
    %v215 = vsel %vm212, %v214, %v210
    %v216 = vrcp.pop %v108
    %v217 = vmul.f32 %v108, %v216
    %v218 = vsub.f32 1.0, %v217
    %v219 = vmul.f32 %v216, %v218
    %v220 = vadd.f32 %v216, %v219
    %vm221 = vweird.f32 %v108
    %vm222 = vweird.f32 %v216
    %vm223 = vmor %vm221, %vm222
    %v224 = vsel %vm223, %v216, %v220
    %v225 = vand.u32 2147483647, %v108
    %vm226 = vcmp.eq.f32.partialorder %v225, 8.507059e+37
    %v227 = vand.u32 %v108, 2147483648
    %v228 = vor.u32 1.1754944e-38, %v227
    %v229 = vsel %vm226, %v228, %v224
    %v230 = vrcp.pop %v110
    %v231 = vmul.f32 %v110, %v230
    %v232 = vsub.f32 1.0, %v231
    %v233 = vmul.f32 %v230, %v232
    %v234 = vadd.f32 %v230, %v233
    %vm235 = vweird.f32 %v110
    %vm236 = vweird.f32 %v230
    %vm237 = vmor %vm235, %vm236
    %v238 = vsel %vm237, %v230, %v234
    %v239 = vand.u32 2147483647, %v110
    %vm240 = vcmp.eq.f32.partialorder %v239, 8.507059e+37
    %v241 = vand.u32 %v110, 2147483648
    %v242 = vor.u32 1.1754944e-38, %v241
    %v243 = vsel %vm240, %v242, %v238
    %v244 = vrcp.pop %v113
    %v245 = vmul.f32 %v113, %v244
    %v246 = vsub.f32 1.0, %v245
    %v247 = vmul.f32 %v244, %v246
    %v248 = vadd.f32 %v244, %v247
    %vm249 = vweird.f32 %v113
    %vm250 = vweird.f32 %v244
    %vm251 = vmor %vm249, %vm250
    %v252 = vsel %vm251, %v244, %v248
    %v253 = vand.u32 2147483647, %v113
    %vm254 = vcmp.eq.f32.partialorder %v253, 8.507059e+37
    %v255 = vand.u32 %v113, 2147483648
    %v256 = vor.u32 1.1754944e-38, %v255
    %v257 = vsel %vm254, %v256, %v252
    %v258 = vrcp.pop %v115
    %v259 = vmul.f32 %v115, %v258
    %v260 = vsub.f32 1.0, %v259
    %v261 = vmul.f32 %v258, %v260
    %v262 = vadd.f32 %v258, %v261
    %vm263 = vweird.f32 %v115
    %vm264 = vweird.f32 %v258
    %vm265 = vmor %vm263, %vm264
    %v266 = vsel %vm265, %v258, %v262
    %v267 = vand.u32 2147483647, %v115
    %vm268 = vcmp.eq.f32.partialorder %v267, 8.507059e+37
    %v269 = vand.u32 %v115, 2147483648
    %v270 = vor.u32 1.1754944e-38, %v269
    %v271 = vsel %vm268, %v270, %v266
    %v272 = vrcp.pop %v118
    %v273 = vmul.f32 %v118, %v272
    %v274 = vsub.f32 1.0, %v273
    %v275 = vmul.f32 %v272, %v274
    %v276 = vadd.f32 %v272, %v275
    %vm277 = vweird.f32 %v118
    %vm278 = vweird.f32 %v272
    %vm279 = vmor %vm277, %vm278
    %v280 = vsel %vm279, %v272, %v276
    %v281 = vand.u32 2147483647, %v118
    %vm282 = vcmp.eq.f32.partialorder %v281, 8.507059e+37
    %v283 = vand.u32 %v118, 2147483648
    %v284 = vor.u32 1.1754944e-38, %v283
    %v285 = vsel %vm282, %v284, %v280
    %v286 = vrcp.pop %v120
    %v287 = vmul.f32 %v120, %v286
    %v288 = vsub.f32 1.0, %v287
    %v289 = vmul.f32 %v286, %v288
    %v290 = vadd.f32 %v286, %v289
    %vm291 = vweird.f32 %v120
    %vm292 = vweird.f32 %v286
    %vm293 = vmor %vm291, %vm292
    %v294 = vsel %vm293, %v286, %v290
    %v295 = vand.u32 2147483647, %v120
    %vm296 = vcmp.eq.f32.partialorder %v295, 8.507059e+37
    %v297 = vand.u32 %v120, 2147483648
    %v298 = vor.u32 1.1754944e-38, %v297
    %v299 = vsel %vm296, %v298, %v294
    %v300 = vrcp.pop %v123
    %v301 = vmul.f32 %v123, %v300
    %v302 = vsub.f32 1.0, %v301
    %v303 = vmul.f32 %v300, %v302
    %v304 = vadd.f32 %v300, %v303
    %vm305 = vweird.f32 %v123
    %vm306 = vweird.f32 %v300
    %vm307 = vmor %vm305, %vm306
    %v308 = vsel %vm307, %v300, %v304
    %v309 = vand.u32 2147483647, %v123
    %vm310 = vcmp.eq.f32.partialorder %v309, 8.507059e+37
    %v311 = vand.u32 %v123, 2147483648
    %v312 = vor.u32 1.1754944e-38, %v311
    %v313 = vsel %vm310, %v312, %v308
    %v314 = vrcp.pop %v125
    %v315 = vmul.f32 %v125, %v314
    %v316 = vsub.f32 1.0, %v315
    %v317 = vmul.f32 %v314, %v316
    %v318 = vadd.f32 %v314, %v317
    %vm319 = vweird.f32 %v125
    %vm320 = vweird.f32 %v314
    %vm321 = vmor %vm319, %vm320
    %v322 = vsel %vm321, %v314, %v318
    %v323 = vand.u32 2147483647, %v125
    %vm324 = vcmp.eq.f32.partialorder %v323, 8.507059e+37
    %v325 = vand.u32 %v125, 2147483648
    %v326 = vor.u32 1.1754944e-38, %v325
    %v327 = vsel %vm324, %v326, %v322
    %v328 = vrcp.pop %v128
    %v329 = vmul.f32 %v128, %v328
    %v330 = vsub.f32 1.0, %v329
    %v331 = vmul.f32 %v328, %v330
    %v332 = vadd.f32 %v328, %v331
    %vm333 = vweird.f32 %v128
    %vm334 = vweird.f32 %v328
    %vm335 = vmor %vm333, %vm334
    %v336 = vsel %vm335, %v328, %v332
    %v337 = vand.u32 2147483647, %v128
    %vm338 = vcmp.eq.f32.partialorder %v337, 8.507059e+37
    %v339 = vand.u32 %v128, 2147483648
    %v340 = vor.u32 1.1754944e-38, %v339
    %v341 = vsel %vm338, %v340, %v336
    %v342 = vrcp.pop %v130
    %v343 = vmul.f32 %v130, %v342
    %v344 = vsub.f32 1.0, %v343
    %v345 = vmul.f32 %v342, %v344
    %v346 = vadd.f32 %v342, %v345
    %vm347 = vweird.f32 %v130
    %vm348 = vweird.f32 %v342
    %vm349 = vmor %vm347, %vm348
    %v350 = vsel %vm349, %v342, %v346
    %v351 = vand.u32 2147483647, %v130
    %vm352 = vcmp.eq.f32.partialorder %v351, 8.507059e+37
    %v353 = vand.u32 %v130, 2147483648
    %v354 = vor.u32 1.1754944e-38, %v353
    %v355 = vsel %vm352, %v354, %v350
    %v356 = vmul.f32 %v145, 0.0078125
    %v357 = vmul.f32 %v159, 0.0078125
    %v358 = vmul.f32 %v173, 0.0078125
    %v359 = vmul.f32 %v187, 0.0078125
    %v360 = vmul.f32 %v201, 0.0078125
    %v361 = vmul.f32 %v215, 0.0078125
    %v362 = vmul.f32 %v229, 0.0078125
    %v363 = vmul.f32 %v243, 0.0078125
    %v364 = vmul.f32 %v257, 0.0078125
    %v365 = vmul.f32 %v271, 0.0078125
    %v366 = vmul.f32 %v285, 0.0078125
    %v367 = vmul.f32 %v299, 0.0078125
    %v368 = vmul.f32 %v313, 0.0078125
    %v369 = vmul.f32 %v327, 0.0078125
    %v370 = vmul.f32 %v341, 0.0078125
    %v371 = vmul.f32 %v355, 0.0078125
    %v372 = vunpack.c.l.bf16 %v19
    %v373 = vunpack.c.l.bf16 %v20
    %v374 = vunpack.c.l.bf16 %v21
    %v375 = vunpack.c.l.bf16 %v22
    %v376 = vunpack.c.l.bf16 %v23
    %v377 = vunpack.c.l.bf16 %v24
    %v378 = vunpack.c.l.bf16 %v25
    %v379 = vunpack.c.l.bf16 %v26
    %v380 = vunpack.c.l.bf16 %v27
    %v381 = vunpack.c.l.bf16 %v28
    %v382 = vunpack.c.l.bf16 %v29
    %v383 = vunpack.c.l.bf16 %v30
    %v384 = vunpack.c.l.bf16 %v31
    %v385 = vunpack.c.l.bf16 %v32
    %v386 = vunpack.c.l.bf16 %v33
    %v387 = vunpack.c.l.bf16 %v34
    %389 = vset.pattern.permute.xlu0 0
    %390 = vperm.xlu0 %389, %v356
    %v391 = vpop.permute.xlu0 %390
    %394 = vset.pattern.permute.xlu0 0
    %395 = vperm.xlu0 %394, %v357
    %v396 = vpop.permute.xlu0 %395
    %399 = vset.pattern.permute.xlu0 0
    %400 = vperm.xlu0 %399, %v358
    %v401 = vpop.permute.xlu0 %400
    %404 = vset.pattern.permute.xlu0 0
    %405 = vperm.xlu0 %404, %v359
    %v406 = vpop.permute.xlu0 %405
    %409 = vset.pattern.permute.xlu0 0
    %410 = vperm.xlu0 %409, %v360
    %v411 = vpop.permute.xlu0 %410
    %414 = vset.pattern.permute.xlu0 0
    %415 = vperm.xlu0 %414, %v361
    %v416 = vpop.permute.xlu0 %415
    %419 = vset.pattern.permute.xlu0 0
    %420 = vperm.xlu0 %419, %v362
    %v421 = vpop.permute.xlu0 %420
    %424 = vset.pattern.permute.xlu0 0
    %425 = vperm.xlu0 %424, %v363
    %v426 = vpop.permute.xlu0 %425
    %429 = vset.pattern.permute.xlu0 0
    %430 = vperm.xlu0 %429, %v364
    %v431 = vpop.permute.xlu0 %430
    %434 = vset.pattern.permute.xlu0 0
    %435 = vperm.xlu0 %434, %v365
    %v436 = vpop.permute.xlu0 %435
    %439 = vset.pattern.permute.xlu0 0
    %440 = vperm.xlu0 %439, %v366
    %v441 = vpop.permute.xlu0 %440
    %444 = vset.pattern.permute.xlu0 0
    %445 = vperm.xlu0 %444, %v367
    %v446 = vpop.permute.xlu0 %445
    %449 = vset.pattern.permute.xlu0 0
    %450 = vperm.xlu0 %449, %v368
    %v451 = vpop.permute.xlu0 %450
    %454 = vset.pattern.permute.xlu0 0
    %455 = vperm.xlu0 %454, %v369
    %v456 = vpop.permute.xlu0 %455
    %459 = vset.pattern.permute.xlu0 0
    %460 = vperm.xlu0 %459, %v370
    %v461 = vpop.permute.xlu0 %460
    %464 = vset.pattern.permute.xlu0 0
    %465 = vperm.xlu0 %464, %v371
    %v466 = vpop.permute.xlu0 %465
    %v468 = vmul.f32 %v391, %v372
    %v469 = vmul.f32 %v396, %v373
    %v470 = vmul.f32 %v401, %v374
    %v471 = vmul.f32 %v406, %v375
    %v472 = vmul.f32 %v411, %v376
    %v473 = vmul.f32 %v416, %v377
    %v474 = vmul.f32 %v421, %v378
    %v475 = vmul.f32 %v426, %v379
    %v476 = vmul.f32 %v431, %v380
    %v477 = vmul.f32 %v436, %v381
    %v478 = vmul.f32 %v441, %v382
    %v479 = vmul.f32 %v446, %v383
    %v480 = vmul.f32 %v451, %v384
    %v481 = vmul.f32 %v456, %v385
    %v482 = vmul.f32 %v461, %v386
    %v483 = vmul.f32 %v466, %v387
    %v484 = vadd.f32 %v468, %v469
    %v485 = vadd.f32 %v484, %v470
    %v486 = vadd.f32 %v485, %v471
    %v487 = vadd.f32 %v486, %v472
    %v488 = vadd.f32 %v487, %v473
    %v489 = vadd.f32 %v488, %v474
    %v490 = vadd.f32 %v489, %v475
    %v491 = vadd.f32 %v490, %v476
    %v492 = vadd.f32 %v491, %v477
    %v493 = vadd.f32 %v492, %v478
    %v494 = vadd.f32 %v493, %v479
    %v495 = vadd.f32 %v494, %v480
    %v496 = vadd.f32 %v495, %v481
    %v497 = vadd.f32 %v496, %v482
    %v498 = vadd.f32 %v497, %v483
    %v499 = vrot.slane %v498, 4
    %v500 = vadd.f32 %v498, %v499
    %v501 = vrot.slane %v500, 2
    %v502 = vadd.f32 %v500, %v501
    %v503 = vrot.slane %v502, 1
    %v504 = vadd.f32 %v502, %v503
    %v505 = vld [vmem:[%s1] sm:$0xff]
    %v506 = vld [vmem:[%s1 + $0x8] sm:$0xff]
    %v507 = vld [vmem:[%s1 + $0x10] sm:$0xff]
    %v508 = vld [vmem:[%s1 + $0x18] sm:$0xff]
    %v509 = vld [vmem:[%s1 + $0x20] sm:$0xff]
    %v510 = vld [vmem:[%s1 + $0x28] sm:$0xff]
    %v511 = vld [vmem:[%s1 + $0x30] sm:$0xff]
    %v512 = vld [vmem:[%s1 + $0x38] sm:$0xff]
    %v513 = vld [vmem:[%s1 + $0x40] sm:$0xff]
    %v514 = vld [vmem:[%s1 + $0x48] sm:$0xff]
    %v515 = vld [vmem:[%s1 + $0x50] sm:$0xff]
    %v516 = vld [vmem:[%s1 + $0x58] sm:$0xff]
    %v517 = vld [vmem:[%s1 + $0x60] sm:$0xff]
    %v518 = vld [vmem:[%s1 + $0x68] sm:$0xff]
    %v519 = vld [vmem:[%s1 + $0x70] sm:$0xff]
    %v520 = vld [vmem:[%s1 + $0x78] sm:$0xff]
    %v521 = vmul.f32 %v391, %v505
    %v522 = vmul.f32 %v396, %v506
    %v523 = vmul.f32 %v401, %v507
    %v524 = vmul.f32 %v406, %v508
    %v525 = vmul.f32 %v411, %v509
    %v526 = vmul.f32 %v416, %v510
    %v527 = vmul.f32 %v421, %v511
    %v528 = vmul.f32 %v426, %v512
    %v529 = vmul.f32 %v431, %v513
    %v530 = vmul.f32 %v436, %v514
    %v531 = vmul.f32 %v441, %v515
    %v532 = vmul.f32 %v446, %v516
    %v533 = vmul.f32 %v451, %v517
    %v534 = vmul.f32 %v456, %v518
    %v535 = vmul.f32 %v461, %v519
    %v536 = vmul.f32 %v466, %v520
    %vm537 = vcmask 130048
    %v538 = vsel %vm537, %v521, 0.0
    %v539 = vsel %vm537, %v522, 0.0
    %v540 = vadd.f32 %v538, %v539
    %v541 = vsel %vm537, %v523, 0.0
    %v542 = vadd.f32 %v540, %v541
    %v543 = vsel %vm537, %v524, 0.0
    %v544 = vadd.f32 %v542, %v543
    %v545 = vsel %vm537, %v525, 0.0
    %v546 = vadd.f32 %v544, %v545
    %v547 = vsel %vm537, %v526, 0.0
    %v548 = vadd.f32 %v546, %v547
    %v549 = vsel %vm537, %v527, 0.0
    %v550 = vadd.f32 %v548, %v549
    %v551 = vsel %vm537, %v528, 0.0
    %v552 = vadd.f32 %v550, %v551
    %v553 = vsel %vm537, %v529, 0.0
    %v554 = vadd.f32 %v552, %v553
    %v555 = vsel %vm537, %v530, 0.0
    %v556 = vadd.f32 %v554, %v555
    %v557 = vsel %vm537, %v531, 0.0
    %v558 = vadd.f32 %v556, %v557
    %v559 = vsel %vm537, %v532, 0.0
    %v560 = vadd.f32 %v558, %v559
    %v561 = vsel %vm537, %v533, 0.0
    %v562 = vadd.f32 %v560, %v561
    %v563 = vsel %vm537, %v534, 0.0
    %v564 = vadd.f32 %v562, %v563
    %v565 = vsel %vm537, %v535, 0.0
    %v566 = vadd.f32 %v564, %v565
    %v567 = vsel %vm537, %v536, 0.0
    %v568 = vadd.f32 %v566, %v567
    %v569 = vrot.slane %v568, 4
    %v570 = vadd.f32 %v568, %v569
    %v571 = vrot.slane %v570, 2
    %v572 = vadd.f32 %v570, %v571
    %v573 = vrot.slane %v572, 1
    %v574 = vadd.f32 %v572, %v573
    %575 = vmatpush.msra.mxu0 %v520
    %576 = vmatpush.msra.mxu0 %v519
    %577 = vmatpush.msra.mxu0 %v518
    %578 = vmatpush.msra.mxu0 %v517
    %579 = vmatpush.msra.mxu0 %v516
    %580 = vmatpush.msra.mxu0 %v515
    %581 = vmatpush.msra.mxu0 %v514
    %582 = vmatpush.msra.mxu0 %v513
    %583 = vmatpush.msra.mxu0 %v512
    %584 = vmatpush.msra.mxu0 %v511
    %585 = vmatpush.msra.mxu0 %v510
    %586 = vmatpush.msra.mxu0 %v509
    %587 = vmatpush.msra.mxu0 %v508
    %588 = vmatpush.msra.mxu0 %v507
    %589 = vmatpush.msra.mxu0 %v506
    %590 = vmatpush.msra.mxu0 %v505
    %591 = vmatmul.f32.gmra.mxu0 %v504
    %v592 = vpop.f32.mrf.mxu0
    %v593 = vadd.f32 %v574, %v592
    %594 = vdwg.mxu0
    %v595 = vld [vmem:[%s2] sm:$0xff]
    %v596 = vld [vmem:[%s2 + $0x8] sm:$0xff]
    %v597 = vld [vmem:[%s3] sm:$0x1]
    %v599 = vsel %vm537, %v593, 0
    %601 = vmatpush.msra.mxu0 0.0
    %602 = vmatpush.msra.mxu0 0.0
    %603 = vmatpush.msra.mxu0 0.0
    %604 = vmatpush.msra.mxu0 0.0
    %605 = vmatpush.msra.mxu0 0.0
    %606 = vmatpush.msra.mxu0 0.0
    %607 = vmatpush.msra.mxu0 0.0
    %608 = vmatpush.msra.mxu0 0.0
    %609 = vmatpush.msra.mxu0 0.0
    %610 = vmatpush.msra.mxu0 0.0
    %611 = vmatpush.msra.mxu0 0.0
    %612 = vmatpush.msra.mxu0 0.0
    %613 = vmatpush.msra.mxu0 0.0
    %614 = vmatpush.msra.mxu0 0.0
    %615 = vmatpush.msra.mxu0 %v596
    %616 = vmatpush.msra.mxu0 %v595
    %617 = vmatmul.f32.gmra.mxu0 %v599
    %v618 = vpop.f32.mrf.mxu0
    %v619 = vadd.f32 %v597, %v618
    %620 = vdwg.mxu0
    %621 = vst [vmem:[#allocation2] sm:$0x1] %v619
    // Predicated region
    $region18: #{tpu_custom_call.1} parent=1 // pred_check
      _
    $region19: #{tpu_custom_call.1} parent=1 // pred_check_branch
      %623 = sbr.rel (0) target = $region21
    $region20: #{tpu_custom_call.1} parent=1 // pred_region
      %625 = vsyncadd [#allocation3], 0
      %s627 = sshll.u32 [#allocation2], 4
      %s628 = int_to_ptr.vmem [resolvable:$true] %s627
      %s629 = sshll.u32 %s4, 4
      %s630 = int_to_ptr.hbm [resolvable:$true] %s629
      %632 = dma.vmem_to_hbm [thread:$0]  %s628, 16, %s630, [#allocation3]
    $region21: #{tpu_custom_call.1} parent=1 // pred_fallthru
      _
    // Predicated region
    $region22: #{tpu_custom_call.1} parent=1 // pred_check
      _
    $region23: #{tpu_custom_call.1} parent=1 // pred_check_branch
      %634 = sbr.rel (0) target = $region25
    $region24: #{tpu_custom_call.1} parent=1 // pred_region
      %636 = dma.done [#allocation3], 16
    $region25: #{tpu_custom_call.1} parent=1 // pred_fallthru
      _
    %637 = vsyncpa [#allocation3], 1

</llo_original>
